<compile_context>
chip_gen: v5e
topology: v5e:2x2
jax: 0.10.0
libtpu: 0.0.40
codegen_flags: <defaults>
</compile_context>

<pallas_src>
import functools

import jax
import jax.numpy as jnp
import numpy as np
from jax import lax
from jax.experimental import pallas as pl
from jax.experimental.pallas import tpu as pltpu

STEP_TOKEN_ID = 32000
NUM_CLASS = 2
CLASS_PAD = 8          # pad class dim to one sublane tile for the MXU operands
IGNORE_INDEX = -100


def prm_head_kernel(h_ref, w_ref, b_ref, lab_ref, probs_ref, nll_ref):
    # logits^T = W @ h^T on the MXU (contract H of both operands, f32 accum).
    # Result (CLASS_PAD, tm): tokens on the lane axis -> all downstream ops and
    # both output stores are lane-dense full vregs.
    logits = lax.dot_general(
        w_ref[...], h_ref[...],
        dimension_numbers=(((1,), (1,)), ((), ())),
        preferred_element_type=jnp.float32,
    ) + b_ref[...]                                   # (CLASS_PAD, tm) f32

    l0 = logits[0:1, :]                              # (1, tm) lane-dense
    l1 = logits[1:2, :]
    m = jnp.maximum(l0, l1)
    e0 = jnp.exp(l0 - m)
    e1 = jnp.exp(l1 - m)
    denom = e0 + e1
    inv = pl.reciprocal(denom, approx=True)          # EUP slot, hidden under DMA

    tm = l0.shape[-1]
    row = lax.broadcasted_iota(jnp.int32, (NUM_CLASS, tm), 0)
    probs_ref[...] = jnp.where(row == 0, e0, e1) * inv   # (2, tm), single store

    lse = m + jnp.log(denom)                         # (1, tm) logsumexp
    lab = lab_ref[...]                               # (1, tm) int32
    picked = jnp.where(lab == 1, l1, l0)
    nll_ref[...] = jnp.where(lab != IGNORE_INDEX, lse - picked, 0.0)


@functools.partial(jax.jit, static_argnames=("tm",))
def prm_head(hidden_flat, weight, bias, labels_flat, tm=1024):
    """Token-classifier head: returns probs (M, 2) and per-token CE nll (M,)."""
    M, H = hidden_flat.shape

    # --- tile selection (memory-bound: the only goal is to saturate HBM) ------
    # The bf16 hidden tile dominates VMEM and is double-buffered by the
    # BlockSpec pipeline; keep 2 * tm * H * 2B under ~24 MiB so it also fits
    # v7x's smaller VMEM, while tm stays large (512-1024 rows) to amortize the
    # ~0.35 us per-grid-step overhead.  tm is a multiple of 128 (sublane + lane
    # friendly); M is padded up, never truncated.
    vmem_budget = 24 * 1024 * 1024
    tm_cap = max(128, (vmem_budget // (2 * H * 2)) // 128 * 128)
    tm_eff = max(128, (min(tm, tm_cap) // 128) * 128)
    m_ceil = ((M + 127) // 128) * 128
    tm_eff = min(tm_eff, m_ceil)                   # don't tile past the problem
    m_pad = ((M + tm_eff - 1) // tm_eff) * tm_eff  # no silently dropped tail
    grid = (m_pad // tm_eff,)

    # --- operand prep (tiny XLA glue outside the kernel) ----------------------
    h = hidden_flat.astype(jnp.bfloat16)           # halve HBM bytes read
    h = jnp.pad(h, ((0, m_pad - M), (0, 0)))
    w = jnp.zeros((CLASS_PAD, H), jnp.bfloat16).at[:NUM_CLASS].set(
        weight.astype(jnp.bfloat16))               # nn.Linear (out, in) layout
    b = jnp.zeros((CLASS_PAD, 1), jnp.float32).at[:NUM_CLASS, 0].set(
        bias.astype(jnp.float32))
    lab = jnp.pad(labels_flat.astype(jnp.int32), (0, m_pad - M),
                  constant_values=IGNORE_INDEX).reshape(1, m_pad)

    probs_t, nll_row = pl.pallas_call(
        prm_head_kernel,
        out_shape=(
            jax.ShapeDtypeStruct((NUM_CLASS, m_pad), jnp.float32),
            jax.ShapeDtypeStruct((1, m_pad), jnp.float32),
        ),
        grid_spec=pltpu.PrefetchScalarGridSpec(
            num_scalar_prefetch=0,
            grid=grid,
            in_specs=[
                pl.BlockSpec((tm_eff, H), lambda i: (i, 0)),
                # weight / bias: constant index_map -> effectively resident; even
                # if re-DMAed per step it is <0.2% of the hidden-tile traffic.
                pl.BlockSpec((CLASS_PAD, H), lambda i: (0, 0)),
                pl.BlockSpec((CLASS_PAD, 1), lambda i: (0, 0)),
                pl.BlockSpec((1, tm_eff), lambda i: (0, i)),   # lane-dense labels
            ],
            out_specs=[
                pl.BlockSpec((NUM_CLASS, tm_eff), lambda i: (0, i)),  # lane-dense
                pl.BlockSpec((1, tm_eff), lambda i: (0, i)),          # lane-dense
            ],
        ),
        compiler_params=pltpu.CompilerParams(
            dimension_semantics=("parallel",),      # megacore-shardable on v7x
            vmem_limit_bytes=48 * 1024 * 1024,      # above v5e's 16 MiB default,
                                                    # below v7x's 64 MiB physical
        ),
    )(h, w, b, lab)

    probs = probs_t[:, :M].T                        # (M, 2)
    nll = nll_row[0, :M]                            # (M,)
    return probs, nll


if __name__ == "__main__":
    key = jax.random.PRNGKey(0)
    B, S, H = 2, 16, 32
    VOCAB = STEP_TOKEN_ID + 1
    k1, k2, k3, k4, k5 = jax.random.split(key, 5)

    # TODO(synk): the real `sentence_encoder` is an external pretrained transformer;
    # it is replaced here by a deterministic embedding lookup (glue, not the kernel).
    emb_table = jax.random.normal(k1, (VOCAB, H), jnp.float32) * 0.02

    # Build input_ids with a fixed number of step tokens per sample (static shapes).
    input_ids = jax.random.randint(k2, (B, S), 0, STEP_TOKEN_ID, dtype=jnp.int32)
    step_positions = jnp.array([7, 15], dtype=jnp.int32)
    input_ids = input_ids.at[:, step_positions].set(STEP_TOKEN_ID)

    labels = jnp.full((B, S), IGNORE_INDEX, dtype=jnp.int32)
    step_labels = jax.random.randint(k3, (B, step_positions.shape[0]), 0, 2,
                                     dtype=jnp.int32)
    labels = labels.at[:, step_positions].set(step_labels)

    # nn.Linear(hidden_size, 2): native (out_features, in_features) weight layout.
    W2 = jax.random.normal(k4, (NUM_CLASS, H), jnp.float32) / jnp.sqrt(H)
    b_col = jax.random.normal(k5, (NUM_CLASS,), jnp.float32) * 0.01

    hidden = emb_table[input_ids]                  # (B, S, H)
    # nn.Dropout(0.1) is identity at inference time (PRM_infer) -> no-op here.

    hidden_flat = hidden.reshape(B * S, H)
    labels_flat = labels.reshape(B * S)

    probs_flat, nll_flat = prm_head(hidden_flat, W2, b_col, labels_flat)
    probs = probs_flat.reshape(B, S, NUM_CLASS)
    nll = nll_flat.reshape(B, S)

    # CrossEntropyLoss(ignore_index=-100), reduction='mean' over non-ignored tokens.
    valid = labels != IGNORE_INDEX
    ce_loss = nll.sum() / jnp.maximum(valid.sum(), 1)

    step_mask = input_ids == STEP_TOKEN_ID
    pred_label = jnp.argmax(probs, axis=-1)
    # After the "pred_label == 0 -> 1 - score" flip, pred_score == p(class=1).
    pred_score = probs[..., 1]
    correct_count = int(((pred_label == labels) & step_mask).sum())
    total_count = int(step_mask.sum())
    # Geometric mean of step scores per sample: prod(scores) ** (1/len(scores)).
    final_pred_score = jnp.exp(
        (jnp.log(pred_score) * step_mask).sum(-1) / step_mask.sum(-1)
    )
    pred_labels = pred_label[:, step_positions]
    loss = ce_loss / B

    # Sanity check against a float64 numpy reference of the kernel math, using the
    # same bf16-rounded hidden/weight the kernel reads.  probs tolerance is loose
    # because the kernel uses the EUP approximate reciprocal; nll has no approx op.
    h64 = np.asarray(hidden_flat.astype(jnp.bfloat16).astype(jnp.float32),
                     dtype=np.float64)
    w64 = np.asarray(W2.astype(jnp.bfloat16).astype(jnp.float32), dtype=np.float64)
    b64 = np.asarray(b_col, dtype=np.float64)[None, :]
    logits_ref = h64 @ w64.T + b64                 # (M, 2)
    m_ref = logits_ref.max(-1, keepdims=True)
    e_ref = np.exp(logits_ref - m_ref)
    probs_ref = e_ref / e_ref.sum(-1, keepdims=True)
    lse_ref = m_ref + np.log(e_ref.sum(-1, keepdims=True))
    lab_np = np.asarray(labels_flat)
    picked_ref = np.take_along_axis(logits_ref, np.clip(lab_np, 0, 1)[:, None],
                                    axis=-1)
    nll_ref = np.where((lab_np != IGNORE_INDEX)[:, None],
                       lse_ref - picked_ref, 0.0)[:, 0]

    np.testing.assert_allclose(np.asarray(probs_flat), probs_ref,
                               rtol=1e-2, atol=1e-2)
    np.testing.assert_allclose(np.asarray(nll_flat), nll_ref,
                               rtol=1e-3, atol=1e-3)

    jax.block_until_ready((loss, final_pred_score, pred_labels))
    print("KERNEL_OK")
</pallas_src>

<mosaic_0001>
module attributes {stable_mosaic.version = 11 : i64} {
  func.func @prm_head_kernel(%arg0: i32, %arg1: memref<128x32xbf16, #tpu.memory_space<vmem>>, %arg2: memref<8x32xbf16, #tpu.memory_space<vmem>>, %arg3: memref<8x1xf32, #tpu.memory_space<vmem>>, %arg4: memref<1x128xi32, #tpu.memory_space<vmem>>, %arg5: memref<2x128xf32, #tpu.memory_space<vmem>>, %arg6: memref<1x128xf32, #tpu.memory_space<vmem>>) attributes {dimension_semantics = [#tpu.dimension_semantics<parallel>], iteration_bounds = array<i64: 1>, scalar_prefetch = 0 : i64, scratch_operands = 0 : i64, tpu.core_type = #tpu.core_type<tc>, window_params = [{transform_indices = @transform_0, window_bounds = array<i64: 128, 32>}, {pipeline_mode = #tpu.pipeline_mode<synchronous>, transform_indices = @transform_1, window_bounds = array<i64: 8, 32>}, {pipeline_mode = #tpu.pipeline_mode<synchronous>, transform_indices = @transform_2, window_bounds = array<i64: 8, 1>}, {transform_indices = @transform_3, window_bounds = array<i64: 1, 128>}, {transform_indices = @transform_4, window_bounds = array<i64: 2, 128>}, {transform_indices = @transform_5, window_bounds = array<i64: 1, 128>}]} {
    %c0 = arith.constant 0 : index
    %c0_0 = arith.constant 0 : index
    %0 = vector.load %arg2[%c0, %c0_0] : memref<8x32xbf16, #tpu.memory_space<vmem>>, vector<8x32xbf16>
    %c0_1 = arith.constant 0 : index
    %c0_2 = arith.constant 0 : index
    %1 = vector.load %arg1[%c0_1, %c0_2] : memref<128x32xbf16, #tpu.memory_space<vmem>>, vector<128x32xbf16>
    %cst = arith.constant dense<0.000000e+00> : vector<8x128xf32>
    %2 = tpu.matmul %0, %1, %cst {dimension_numbers = #tpu.dot_dimension_numbers<[1], [1], [0], [0], [0, 0, 1, 0], [], []>} : vector<8x32xbf16>, vector<128x32xbf16>, vector<8x128xf32> -> vector<8x128xf32>
    %c0_3 = arith.constant 0 : index
    %c0_4 = arith.constant 0 : index
    %3 = vector.load %arg3[%c0_3, %c0_4] : memref<8x1xf32, #tpu.memory_space<vmem>>, vector<8x1xf32>
    %4 = vector.broadcast %3 : vector<8x1xf32> to vector<8x128xf32>
    %5 = arith.addf %2, %4 : vector<8x128xf32>
    %6 = vector.extract_strided_slice %5 {offsets = [0, 0], sizes = [1, 128], strides = [1, 1]} : vector<8x128xf32> to vector<1x128xf32>
    %7 = vector.extract_strided_slice %5 {offsets = [1, 0], sizes = [1, 128], strides = [1, 1]} : vector<8x128xf32> to vector<1x128xf32>
    %8 = arith.maximumf %6, %7 : vector<1x128xf32>
    %9 = arith.subf %6, %8 : vector<1x128xf32>
    %10 = math.exp %9 : vector<1x128xf32>
    %11 = arith.subf %7, %8 : vector<1x128xf32>
    %12 = math.exp %11 : vector<1x128xf32>
    %13 = arith.addf %10, %12 : vector<1x128xf32>
    %14 = tpu.reciprocal %13 {approx = true} : vector<1x128xf32> -> vector<1x128xf32>
    %15 = tpu.iota {dimensions = array<i32: 0>} : vector<2x128xi32>
    %c0_i32 = arith.constant 0 : i32
    %16 = vector.broadcast %c0_i32 : i32 to vector<2x128xi32>
    %17 = arith.cmpi eq, %15, %16 : vector<2x128xi32>
    %18 = vector.shape_cast %10 : vector<1x128xf32> to vector<1x128xf32>
    %19 = vector.broadcast %18 : vector<1x128xf32> to vector<2x128xf32>
    %20 = vector.shape_cast %12 : vector<1x128xf32> to vector<1x128xf32>
    %21 = vector.broadcast %20 : vector<1x128xf32> to vector<2x128xf32>
    %22 = arith.select %17, %19, %21 : vector<2x128xi1>, vector<2x128xf32>
    %23 = vector.broadcast %14 : vector<1x128xf32> to vector<2x128xf32>
    %24 = arith.mulf %22, %23 : vector<2x128xf32>
    %c0_5 = arith.constant 0 : index
    %c0_6 = arith.constant 0 : index
    %25 = vector.load %arg5[%c0_5, %c0_6] : memref<2x128xf32, #tpu.memory_space<vmem>>, vector<2x128xf32>
    tpu.vector_store %arg5[%c0_5, %c0_6], %24 {strides = array<i32>} : memref<2x128xf32, #tpu.memory_space<vmem>>, vector<2x128xf32>,
    %26 = math.log %13 : vector<1x128xf32>
    %27 = arith.addf %8, %26 : vector<1x128xf32>
    %c0_7 = arith.constant 0 : index
    %c0_8 = arith.constant 0 : index
    %28 = vector.load %arg4[%c0_7, %c0_8] : memref<1x128xi32, #tpu.memory_space<vmem>>, vector<1x128xi32>
    %c1_i32 = arith.constant 1 : i32
    %29 = vector.broadcast %c1_i32 : i32 to vector<1x128xi32>
    %30 = arith.cmpi eq, %28, %29 : vector<1x128xi32>
    %31 = arith.select %30, %7, %6 : vector<1x128xi1>, vector<1x128xf32>
    %c-100_i32 = arith.constant -100 : i32
    %32 = vector.broadcast %c-100_i32 : i32 to vector<1x128xi32>
    %33 = arith.cmpi ne, %28, %32 : vector<1x128xi32>
    %34 = arith.subf %27, %31 : vector<1x128xf32>
    %cst_9 = arith.constant 0.000000e+00 : f32
    %35 = vector.broadcast %cst_9 : f32 to vector<1x128xf32>
    %36 = arith.select %33, %34, %35 : vector<1x128xi1>, vector<1x128xf32>
    %c0_10 = arith.constant 0 : index
    %c0_11 = arith.constant 0 : index
    %37 = vector.load %arg6[%c0_10, %c0_11] : memref<1x128xf32, #tpu.memory_space<vmem>>, vector<1x128xf32>
    tpu.vector_store %arg6[%c0_10, %c0_11], %36 {strides = array<i32>} : memref<1x128xf32, #tpu.memory_space<vmem>>, vector<1x128xf32>,
    return
  }
  func.func @transform_0(%arg0: i32) -> (i32, i32) {
    %c0_i32 = arith.constant 0 : i32
    %c0_i32_0 = arith.constant 0 : i32
    return %arg0, %c0_i32 : i32, i32
  }
  func.func @transform_1(%arg0: i32) -> (i32, i32) {
    %c0_i32 = arith.constant 0 : i32
    %c0_i32_0 = arith.constant 0 : i32
    %c0_i32_1 = arith.constant 0 : i32
    return %c0_i32, %c0_i32_0 : i32, i32
  }
  func.func @transform_2(%arg0: i32) -> (i32, i32) {
    %c0_i32 = arith.constant 0 : i32
    %c0_i32_0 = arith.constant 0 : i32
    %c0_i32_1 = arith.constant 0 : i32
    return %c0_i32, %c0_i32_0 : i32, i32
  }
  func.func @transform_3(%arg0: i32) -> (i32, i32) {
    %c0_i32 = arith.constant 0 : i32
    %c0_i32_0 = arith.constant 0 : i32
    return %c0_i32, %arg0 : i32, i32
  }
  func.func @transform_4(%arg0: i32) -> (i32, i32) {
    %c0_i32 = arith.constant 0 : i32
    %c0_i32_0 = arith.constant 0 : i32
    return %c0_i32, %arg0 : i32, i32
  }
  func.func @transform_5(%arg0: i32) -> (i32, i32) {
    %c0_i32 = arith.constant 0 : i32
    %c0_i32_0 = arith.constant 0 : i32
    return %c0_i32, %arg0 : i32, i32
  }
}

</mosaic_0001>

<llo_original>
// kernel: prm_head.1
$region0: #{prm_head.1}
  #allocation0 [shape = 'u32[]', space=smem, size = 0x4, offset = 0x4, fixed_abs, tag = 'smem constant byte address 0x4 - core index']
  #allocation1 [shape = 'u32[72,128]{1,0:T(1,128)}', space=vmem, size = 0x9000, scoped, tag = 'internal scratch']
  %s0 = inlined_call_operand.vmem [shape: bf16[128,32], index: 0, kind: input, shape index: {}]
  %s1 = inlined_call_operand.vmem [shape: bf16[8,32], index: 1, kind: input, shape index: {}]
  %s2 = inlined_call_operand.vmem [shape: f32[8,1], index: 2, kind: input, shape index: {}]
  %s3 = inlined_call_operand.vmem [shape: s32[1,128], index: 3, kind: input, shape index: {}]
  %s4 = inlined_call_operand.vmem [shape: f32[2,128], index: 4, kind: output, shape index: {0}]
  %s5 = inlined_call_operand.vmem [shape: f32[1,128], index: 5, kind: output, shape index: {1}]
  %6 = xla_tuple %s4, %s5
  %s7 = sld [smem:[#allocation0]]
  $region34: #{prm_head.1} parent=0
    _
  %s9 = ssub.s32 1, %s7
  %s10 = scalar_select 0, %s9, %s7
  // Predicated region
  $region2: #{prm_head.1} parent=0 // pred_check
    _
  $region3: #{prm_head.1} parent=0 // pred_check_branch
    %12 = sbr.rel (0) target = $region5
  $region4: #{prm_head.1} parent=0 // pred_region
    _
  $region5: #{prm_head.1} parent=0 // pred_fallthru
    _
  // Predicated region
  $region6: #{prm_head.1} parent=0 // pred_check
    _
  $region7: #{prm_head.1} parent=0 // pred_check_branch
    %14 = sbr.rel (0) target = $region9
  $region8: #{prm_head.1} parent=0 // pred_region
    _
  $region9: #{prm_head.1} parent=0 // pred_fallthru
    _
  // Predicated region
  $region10: #{prm_head.1} parent=0 // pred_check
    _
  $region11: #{prm_head.1} parent=0 // pred_check_branch
    %16 = sbr.rel (0) target = $region13
  $region12: #{prm_head.1} parent=0 // pred_region
    _
  $region13: #{prm_head.1} parent=0 // pred_fallthru
    _
  // Predicated region
  $region14: #{prm_head.1} parent=0 // pred_check
    _
  $region15: #{prm_head.1} parent=0 // pred_check_branch
    %18 = sbr.rel (0) target = $region17
  $region16: #{prm_head.1} parent=0 // pred_region
    _
  $region17: #{prm_head.1} parent=0 // pred_fallthru
    _
  %v19 = vld [vmem:[%s1] sm:$0xf]
  %v20 = vld [vmem:[%s0] sm:$0xf]
  %v21 = vld [vmem:[%s0 + $0x4] sm:$0xf]
  %v22 = vld [vmem:[%s0 + $0x8] sm:$0xf]
  %v23 = vld [vmem:[%s0 + $0xc] sm:$0xf]
  %v24 = vld [vmem:[%s0 + $0x10] sm:$0xf]
  %v25 = vld [vmem:[%s0 + $0x14] sm:$0xf]
  %v26 = vld [vmem:[%s0 + $0x18] sm:$0xf]
  %v27 = vld [vmem:[%s0 + $0x1c] sm:$0xf]
  %v28 = vld [vmem:[%s0 + $0x20] sm:$0xf]
  %v29 = vld [vmem:[%s0 + $0x24] sm:$0xf]
  %v30 = vld [vmem:[%s0 + $0x28] sm:$0xf]
  %v31 = vld [vmem:[%s0 + $0x2c] sm:$0xf]
  %v32 = vld [vmem:[%s0 + $0x30] sm:$0xf]
  %v33 = vld [vmem:[%s0 + $0x34] sm:$0xf]
  %v34 = vld [vmem:[%s0 + $0x38] sm:$0xf]
  %v35 = vld [vmem:[%s0 + $0x3c] sm:$0xf]
  %v36 = vld [vmem:[%s2] sm:$0xff]
  %38 = vset.pattern.permute.xlu0 0
  %39 = vperm.xlu0 %38, %v36
  %v40 = vpop.permute.xlu0 %39
  %v58 = vunpack.c.l.b16 %v20
  %v59 = vunpack.c.l.b16 %v21
  %v60 = vunpack.c.l.b16 %v22
  %v61 = vunpack.c.l.b16 %v23
  %v62 = vunpack.c.l.b16 %v24
  %v63 = vunpack.c.l.b16 %v25
  %v64 = vunpack.c.l.b16 %v26
  %v65 = vunpack.c.l.b16 %v27
  %v66 = vunpack.c.l.b16 %v28
  %v67 = vunpack.c.l.b16 %v29
  %v68 = vunpack.c.l.b16 %v30
  %v69 = vunpack.c.l.b16 %v31
  %v70 = vunpack.c.l.b16 %v32
  %v71 = vunpack.c.l.b16 %v33
  %v72 = vunpack.c.l.b16 %v34
  %v73 = vunpack.c.l.b16 %v35
  %v74 = vpack.c.b16 %v59, %v58
  %v75 = vpack.c.b16 %v61, %v60
  %v76 = vpack.c.b16 %v63, %v62
  %v77 = vpack.c.b16 %v65, %v64
  %v78 = vpack.c.b16 %v67, %v66
  %v79 = vpack.c.b16 %v69, %v68
  %v80 = vpack.c.b16 %v71, %v70
  %v81 = vpack.c.b16 %v73, %v72
  %vm82 = vcmask 261120
  %v84 = vsel %vm82, %v19, 0
  %v87 = vsel %vm82, %v74, 0
  %v90 = vsel %vm82, %v75, 0
  %v93 = vsel %vm82, %v76, 0
  %v96 = vsel %vm82, %v77, 0
  %v99 = vsel %vm82, %v78, 0
  %v102 = vsel %vm82, %v79, 0
  %v105 = vsel %vm82, %v80, 0
  %v108 = vsel %vm82, %v81, 0
  %110 = vmatpush.bf16.xpose.msra.mxu0 %v108
  %111 = vmatpush.bf16.xpose.msra.mxu0 %v105
  %112 = vmatpush.bf16.xpose.msra.mxu0 %v102
  %113 = vmatpush.bf16.xpose.msra.mxu0 %v99
  %114 = vmatpush.bf16.xpose.msra.mxu0 %v96
  %115 = vmatpush.bf16.xpose.msra.mxu0 %v93
  %116 = vmatpush.bf16.xpose.msra.mxu0 %v90
  %117 = vmatpush.bf16.xpose.msra.mxu0 %v87
  %118 = vmatmul.bf16.gmra.mxu0 %v84
  %v119 = vpop.f32.mrf.mxu0
  %v120 = vadd.f32 %v40, %v119
  %v121 = vpop.f32.mrf.mxu0
  %122 = vdwg.mxu0
  %v124 = vrot.slane %v120, 1
  %v126 = vmax.f32 %v120, %v124
  %v127 = vsub.f32 %v120, %v126
  %v128 = vmul.f32 %v127, 1.442695
  %v129 = vpow.pop %v128
  %v131 = vrot.slane %v126, 7
  %v133 = vsub.f32 %v120, %v131
  %v134 = vmul.f32 %v133, 1.442695
  %v135 = vpow.pop %v134
  %v137 = vrot.slane %v135, 1
  %v139 = vadd.f32 %v129, %v137
  %v140 = vrcp.pop %v139
  %v141 = vlaneseq
  %v142 = vshrl.u32 %v141, 7
  %vm143 = vcmp.eq.s32.totalorder %v142, 0
  %v144 = vperm.slane %v129, 0
  %v145 = vperm.slane %v135, 1
  %v146 = vsel %vm143, %v144, %v145
  %v147 = vperm.slane %v140, 0
  %v148 = vmul.f32 %v146, %v147
  %149 = vst [vmem:[%s4] sm:$0x3] %v148
  %v150 = vlog2.pop %v139
  %v151 = vmul.f32 %v150, 0.6931472
  %v152 = vadd.f32 %v126, %v151
  %v153 = vld [vmem:[%s3] sm:$0x1]
  %vm154 = vcmp.eq.s32.totalorder %v153, 1
  %155 = vst [vmem:[#allocation1] sm:$0xff] %v120
  %s156 = scalar_lea.vmem [#allocation1], 1
  %v157 = vld [vmem:[%s156] ss:$9 sm:$0xff]
  %v159 = vsel %vm154, %v157, %v120
  %vm160 = vcmp.ne.s32.totalorder %v153, 4294967196
  %v161 = vsub.f32 %v152, %v159
  %v162 = vsel %vm160, %v161, 0.0
  %163 = vst [vmem:[%s5] sm:$0x1] %v162
  // Predicated region
  $region18: #{prm_head.1} parent=0 // pred_check
    _
  $region19: #{prm_head.1} parent=0 // pred_check_branch
    %165 = sbr.rel (0) target = $region21
  $region20: #{prm_head.1} parent=0 // pred_region
    _
  $region21: #{prm_head.1} parent=0 // pred_fallthru
    _
  // Predicated region
  $region22: #{prm_head.1} parent=0 // pred_check
    _
  $region23: #{prm_head.1} parent=0 // pred_check_branch
    %167 = sbr.rel (0) target = $region25
  $region24: #{prm_head.1} parent=0 // pred_region
    _
  $region25: #{prm_head.1} parent=0 // pred_fallthru
    _
  // Predicated region
  $region26: #{prm_head.1} parent=0 // pred_check
    _
  $region27: #{prm_head.1} parent=0 // pred_check_branch
    %169 = sbr.rel (0) target = $region29
  $region28: #{prm_head.1} parent=0 // pred_region
    _
  $region29: #{prm_head.1} parent=0 // pred_fallthru
    _
  // Predicated region
  $region30: #{prm_head.1} parent=0 // pred_check
    _
  $region31: #{prm_head.1} parent=0 // pred_check_branch
    %171 = sbr.rel (0) target = $region33
  $region32: #{prm_head.1} parent=0 // pred_region
    _
  $region33: #{prm_head.1} parent=0 // pred_fallthru
    _

</llo_original>
